<compile_context>
chip_gen: v5e
topology: v5e:2x2
jax: 0.10.0
libtpu: 0.0.40
codegen_flags: <defaults>
</compile_context>

<pallas_src>
import math

import jax
import jax.numpy as jnp
import numpy as np
from jax.experimental import pallas as pl
from jax.experimental.pallas import tpu as pltpu


# ----------------------------------------------------------------------------
# Buffer construction (deterministic, mirrors the PyTorch __init__)
# ----------------------------------------------------------------------------
def make_positional_encoding(d_model: int, max_len: int = 5000) -> jnp.ndarray:
    """pe exactly like the PyTorch module (before unsqueeze): [max_len, d_model], f32."""
    assert d_model % 2 == 0, "PositionalEncoding assumes even d_model (like the original)"
    position = jnp.arange(0, max_len, dtype=jnp.float32)[:, None]             # [max_len, 1]
    div_term = jnp.exp(
        jnp.arange(0, d_model, 2, dtype=jnp.float32) * (-math.log(10000.0) / d_model)
    )                                                                          # [d_model//2]
    ang = position * div_term                                                  # [max_len, d_model//2]
    pe = jnp.zeros((max_len, d_model), dtype=jnp.float32)
    pe = pe.at[:, 0::2].set(jnp.sin(ang))
    pe = pe.at[:, 1::2].set(jnp.cos(ang))
    return pe                                                                  # [max_len, d_model]


# ----------------------------------------------------------------------------
# Pallas kernel: o[:, b*D:(b+1)*D] = x[:, b*D:(b+1)*D] + pe   for each batch b
# ----------------------------------------------------------------------------
def _pe_add_kernel(x_ref, pe_ref, o_ref):
    # x_ref / o_ref : [ts, W] VMEM tile, W = batch * d_model (lane-dense slab)
    # pe_ref        : [ts, D] VMEM tile (same rows); D == W if pre-broadcast.
    d = pe_ref.shape[-1]
    n_rep = x_ref.shape[-1] // d
    for b in range(n_rep):                 # static unroll; lane-aligned static slices
        sl = slice(b * d, (b + 1) * d)
        # Re-read pe_ref per slab: a VMEM vld is essentially free on this
        # DMA-bound kernel, whereas hoisting the whole [ts, D] tile into vregs
        # would blow the 64-vreg file and spill via the single store slot.
        o_ref[:, sl] = x_ref[:, sl] + pe_ref[...]


def _choose_row_tile(n_rows: int, row_bytes: int, row_align: int,
                     target_tile_bytes: int = 8 << 20) -> int:
    """Row tile: ~8 MiB of x per tile, sublane-packing aligned, >=4 even grid steps
    when the row count allows (so both v7x TensorCores get >=2 pipelined steps)."""
    if n_rows <= row_align:
        return int(n_rows)
    ts = max(row_align, (target_tile_bytes // max(1, row_bytes)) // row_align * row_align)
    ts = min(ts, n_rows)
    for min_steps in (4, 2):
        if n_rows >= min_steps * row_align and pl.cdiv(n_rows, ts) < min_steps:
            ts = max(row_align, (n_rows // min_steps) // row_align * row_align)
    steps = pl.cdiv(n_rows, ts)
    # Mild preference for an even step count (balance across 2 v7x cores).
    if (steps % 2 == 1 and ts % row_align == 0 and ts >= 2 * row_align
            and pl.cdiv(n_rows, ts - row_align) % 2 == 0):
        ts -= row_align
    return int(ts)


def positional_encoding_forward(x: jnp.ndarray, pe2d: jnp.ndarray) -> jnp.ndarray:
    """x: [seq_len, batch, d_model]; pe2d: [max_len, d_model] already in x.dtype."""
    S, B, D = x.shape
    max_len, d = pe2d.shape
    assert d == D, f"pe d_model {d} != x d_model {D}"
    assert S <= max_len, f"seq_len {S} exceeds max_len {max_len}"
    W = B * D
    x2d = x.reshape(S, W)                     # contiguous => free reshape, lane-dense slab

    if D % 128 == 0:
        # Pass the FULL pe buffer; the BlockSpec only DMAs the row tiles the grid
        # touches, so there is no per-call slice/cast pass over pe.
        pe_in, pe_w = pe2d, D
    else:
        # Non-lane-aligned d_model: per-batch slabs would straddle vreg lanes and
        # force masked stores/XLU shuffles — pre-broadcast pe to full slab width.
        pe_in = jnp.broadcast_to(pe2d[:S, None, :], (S, B, D)).reshape(S, W)
        pe_w = W

    itemsize = x.dtype.itemsize
    row_align = 8 * max(1, 4 // itemsize)     # f32: 8 rows, bf16: 16, int8/fp8: 32
    ts = _choose_row_tile(S, W * itemsize, row_align)
    grid = (pl.cdiv(S, ts),)

    # VMEM budget from the actual buffers: double-buffered x-in + x-out + pe + margin.
    x_tile_bytes = ts * W * itemsize
    pe_tile_bytes = ts * pe_w * pe_in.dtype.itemsize
    vmem_bytes = 2 * x_tile_bytes + 2 * x_tile_bytes + 2 * pe_tile_bytes + (2 << 20)
    vmem_bytes = max(int(vmem_bytes), 16 << 20)

    out2d = pl.pallas_call(
        _pe_add_kernel,
        out_shape=jax.ShapeDtypeStruct((S, W), x.dtype),
        grid_spec=pltpu.PrefetchScalarGridSpec(
            num_scalar_prefetch=0,
            grid=grid,
            in_specs=[
                pl.BlockSpec((ts, W), lambda i: (i, 0)),      # x row tile (full width)
                pl.BlockSpec((ts, pe_w), lambda i: (i, 0)),   # matching pe rows
            ],
            out_specs=pl.BlockSpec((ts, W), lambda i: (i, 0)),
        ),
        compiler_params=pltpu.CompilerParams(
            dimension_semantics=("parallel",),
            vmem_limit_bytes=vmem_bytes,
        ),
        # NOTE: no input_output_aliases — aliasing a non-donated jit parameter
        # makes XLA insert a defensive full copy of x, doubling HBM reads.
    )(x2d, pe_in)
    return out2d.reshape(S, B, D)


class PositionalEncoding:
    """Mirrors the PyTorch module; pe is built in f32 (identical formula) and
    pre-cast ONCE to the model dtype at init so the forward path does no
    per-call cast/slice passes over pe.

    Note: when x is bf16/fp16, PyTorch's `x + fp32 pe` promotes to f32; here we
    keep x.dtype and add pe rounded to x.dtype (documented numerics choice)."""

    def __init__(self, d_model: int, max_len: int = 5000, dtype=jnp.float32):
        self.d_model = d_model
        self.max_len = max_len
        self.pe_f32 = make_positional_encoding(d_model, max_len)   # [max_len, d_model] f32
        self.pe = self.pe_f32.astype(dtype)                        # pre-cast, hoisted out of forward

    def __call__(self, x: jnp.ndarray) -> jnp.ndarray:
        return positional_encoding_forward(x, self.pe)


# ----------------------------------------------------------------------------
# Demo / correctness check
# ----------------------------------------------------------------------------
if __name__ == "__main__":
    # Small shapes consistent with the module's forward: x: [seq_len, batch, d_model]
    seq_len, batch, d_model = 16, 2, 256
    max_len = 64

    key = jax.random.PRNGKey(0)
    x = jax.random.normal(key, (seq_len, batch, d_model), dtype=jnp.float32)

    module = PositionalEncoding(d_model, max_len=max_len, dtype=x.dtype)
    fwd = jax.jit(lambda xx: positional_encoding_forward(xx, module.pe))
    out = jax.block_until_ready(fwd(x))

    # Reference (plain JAX broadcasting, identical to PyTorch semantics)
    ref = x + module.pe_f32[:seq_len][:, None, :]
    np.testing.assert_allclose(np.asarray(out), np.asarray(ref), rtol=1e-6, atol=1e-6)

    print("KERNEL_OK")
</pallas_src>

<mosaic_0001>
module attributes {stable_mosaic.version = 11 : i64} {
  func.func @_pe_add_kernel(%arg0: i32, %arg1: memref<8x512xf32, #tpu.memory_space<vmem>>, %arg2: memref<8x256xf32, #tpu.memory_space<vmem>>, %arg3: memref<8x512xf32, #tpu.memory_space<vmem>>) attributes {dimension_semantics = [#tpu.dimension_semantics<parallel>], iteration_bounds = array<i64: 2>, scalar_prefetch = 0 : i64, scratch_operands = 0 : i64, tpu.core_type = #tpu.core_type<tc>, window_params = [{transform_indices = @transform_0, window_bounds = array<i64: 8, 512>}, {transform_indices = @transform_1, window_bounds = array<i64: 8, 256>}, {transform_indices = @transform_2, window_bounds = array<i64: 8, 512>}]} {
    %c0 = arith.constant 0 : index
    %c0_0 = arith.constant 0 : index
    %0 = vector.load %arg1[%c0, %c0_0] : memref<8x512xf32, #tpu.memory_space<vmem>>, vector<8x256xf32>
    %c0_1 = arith.constant 0 : index
    %c0_2 = arith.constant 0 : index
    %1 = vector.load %arg2[%c0_1, %c0_2] : memref<8x256xf32, #tpu.memory_space<vmem>>, vector<8x256xf32>
    %2 = arith.addf %0, %1 : vector<8x256xf32>
    %c0_3 = arith.constant 0 : index
    %c0_4 = arith.constant 0 : index
    %3 = vector.load %arg3[%c0_3, %c0_4] : memref<8x512xf32, #tpu.memory_space<vmem>>, vector<8x256xf32>
    tpu.vector_store %arg3[%c0_3, %c0_4], %2 {strides = array<i32>} : memref<8x512xf32, #tpu.memory_space<vmem>>, vector<8x256xf32>,
    %c0_5 = arith.constant 0 : index
    %c256 = arith.constant 256 : index
    %4 = vector.load %arg1[%c0_5, %c256] : memref<8x512xf32, #tpu.memory_space<vmem>>, vector<8x256xf32>
    %c0_6 = arith.constant 0 : index
    %c0_7 = arith.constant 0 : index
    %5 = vector.load %arg2[%c0_6, %c0_7] : memref<8x256xf32, #tpu.memory_space<vmem>>, vector<8x256xf32>
    %6 = arith.addf %4, %5 : vector<8x256xf32>
    %c0_8 = arith.constant 0 : index
    %c256_9 = arith.constant 256 : index
    %7 = vector.load %arg3[%c0_8, %c256_9] : memref<8x512xf32, #tpu.memory_space<vmem>>, vector<8x256xf32>
    tpu.vector_store %arg3[%c0_8, %c256_9], %6 {strides = array<i32>} : memref<8x512xf32, #tpu.memory_space<vmem>>, vector<8x256xf32>,
    return
  }
  func.func @transform_0(%arg0: i32) -> (i32, i32) {
    %c0_i32 = arith.constant 0 : i32
    %c0_i32_0 = arith.constant 0 : i32
    return %arg0, %c0_i32 : i32, i32
  }
  func.func @transform_1(%arg0: i32) -> (i32, i32) {
    %c0_i32 = arith.constant 0 : i32
    %c0_i32_0 = arith.constant 0 : i32
    return %arg0, %c0_i32 : i32, i32
  }
  func.func @transform_2(%arg0: i32) -> (i32, i32) {
    %c0_i32 = arith.constant 0 : i32
    %c0_i32_0 = arith.constant 0 : i32
    return %arg0, %c0_i32 : i32, i32
  }
}

</mosaic_0001>

<llo_original>
// kernel: _lambda_.1
$region0: #{_lambda_.1}
  #allocation0 [shape = 'u32[]', space=smem, size = 0x4, offset = 0x4, fixed_abs, tag = 'smem constant byte address 0x4 - core index']
  #allocation1 [shape = 'u32[72,128]{1,0:T(1,128)}', space=vmem, size = 0x9000, scoped, tag = 'internal scratch']
  %s0 = inlined_call_operand.vmem [shape: f32[16,512], index: 0, kind: input, shape index: {}]
  %s1 = inlined_call_operand.vmem [shape: f32[64,256], index: 1, kind: input, shape index: {}]
  %s2 = inlined_call_operand.vmem [shape: f32[16,512], index: 2, kind: output, shape index: {}]
  %s3 = sld [smem:[#allocation0]]
  $region41: #{_lambda_.1} parent=0
    _
  %s5 = ssub.s32 1, %s3
  %s6 = scalar_select 0, %s5, %s3
  loop: start=0, step=1, limit=4
  $region2: #{_lambda_.1} parent=0 // loop_pre_header
    _
  $region3: #{_lambda_.1} parent=0 // loop_header
    %s8 = sphi 0, %s12
    %p9 = scmp.ge.s32.totalorder %s8, 4
    %s18 = sphi 0, %s20
    %s21 = sphi 0, %s18
    %s22 = sphi 0, %s21
    %s38 = sphi 0, %s22
    %s44 = sphi 0, %s46
    %s47 = sphi 0, %s44
    %s48 = sphi 0, %s47
    %s64 = sphi 0, %s48
    %s70 = sphi 0, %s72
    %s73 = sphi 0, %s70
    %s74 = sphi 0, %s73
    %s90 = sphi 0, %s74
  $region4: #{_lambda_.1} parent=0 // loop_header_branch
    %11 = sbr.rel (%p9) target = $region8
  $region5: #{_lambda_.1} parent=0 // loop_body
    %s13 = ssub.s32 %s8, 1
    %s14 = ssub.s32 %s8, 2
    %s15 = sadd.s32 %s8, 1
    %s16 = ssub.s32 %s8, %s15
    %p17 = scmp.eq.s32.totalorder %s16, 0
    %s19 = sadd.s32 %s18, 1
    %s20 = scalar_select %p17, %s18, %s19
    %p23 = pneg %p17
    %p24 = scmp.eq.s32.totalorder %s8, 1
    %p25 = por %p23, %p24
    %p26 = scmp.ne.s32.totalorder %s18, %s21
    %p27 = scmp.eq.s32.totalorder %s8, 0
    %p28 = por %p26, %p27
    %p29 = scmp.ne.s32.totalorder %s18, %s21
    %p30 = scmp.eq.s32.totalorder %s13, 1
    %p31 = por %p29, %p30
    %p32 = scmp.ne.s32.totalorder %s21, %s22
    %p33 = scmp.eq.s32.totalorder %s13, 0
    %p34 = por %p32, %p33
    %p35 = scmp.ne.s32.totalorder %s21, %s22
    %p36 = scmp.eq.s32.totalorder %s14, 1
    %p37 = por %p35, %p36
    %p39 = scmp.ne.s32.totalorder %s22, %s38
    %p40 = scmp.eq.s32.totalorder %s14, 0
    %p41 = por %p39, %p40
    %s42 = ssub.s32 %s8, %s15
    %p43 = scmp.eq.s32.totalorder %s42, 0
    %s45 = sadd.s32 %s44, 1
    %s46 = scalar_select %p43, %s44, %s45
    %p49 = pneg %p43
    %p50 = scmp.eq.s32.totalorder %s8, 1
    %p51 = por %p49, %p50
    %p52 = scmp.ne.s32.totalorder %s44, %s47
    %p53 = scmp.eq.s32.totalorder %s8, 0
    %p54 = por %p52, %p53
    %p55 = scmp.ne.s32.totalorder %s44, %s47
    %p56 = scmp.eq.s32.totalorder %s13, 1
    %p57 = por %p55, %p56
    %p58 = scmp.ne.s32.totalorder %s47, %s48
    %p59 = scmp.eq.s32.totalorder %s13, 0
    %p60 = por %p58, %p59
    %p61 = scmp.ne.s32.totalorder %s47, %s48
    %p62 = scmp.eq.s32.totalorder %s14, 1
    %p63 = por %p61, %p62
    %p65 = scmp.ne.s32.totalorder %s48, %s64
    %p66 = scmp.eq.s32.totalorder %s14, 0
    %p67 = por %p65, %p66
    %s68 = ssub.s32 %s8, %s15
    %p69 = scmp.eq.s32.totalorder %s68, 0
    %s71 = sadd.s32 %s70, 1
    %s72 = scalar_select %p69, %s70, %s71
    %p75 = pneg %p69
    %p76 = scmp.eq.s32.totalorder %s8, 1
    %p77 = por %p75, %p76
    %p78 = scmp.ne.s32.totalorder %s70, %s73
    %p79 = scmp.eq.s32.totalorder %s8, 0
    %p80 = por %p78, %p79
    %p81 = scmp.ne.s32.totalorder %s70, %s73
    %p82 = scmp.eq.s32.totalorder %s13, 1
    %p83 = por %p81, %p82
    %p84 = scmp.ne.s32.totalorder %s73, %s74
    %p85 = scmp.eq.s32.totalorder %s13, 0
    %p86 = por %p84, %p85
    %p87 = scmp.ne.s32.totalorder %s73, %s74
    %p88 = scmp.eq.s32.totalorder %s14, 1
    %p89 = por %p87, %p88
    %p91 = scmp.ne.s32.totalorder %s74, %s90
    %p92 = scmp.eq.s32.totalorder %s14, 0
    %p93 = por %p91, %p92
    %p94 = scmp.le.s32.totalorder 1, %s8
    %p95 = scmp.lt.s32.totalorder %s8, 3
    %p96 = pnand %p94, %p95
    %p97 = pneg %p96
    // Predicated region
    $region9: #{_lambda_.1} parent=5 // pred_check
      _
    $region10: #{_lambda_.1} parent=5 // pred_check_branch
      %99 = sbr.rel (%p96) target = $region12
    $region11: #{_lambda_.1} parent=5 // pred_region
      %s100 = ssub.s32 %s8, 1
    $region12: #{_lambda_.1} parent=5 // pred_fallthru
      _
    %p101 = scmp.lt.s32.totalorder %s8, 2
    // Predicated region
    $region13: #{_lambda_.1} parent=5 // pred_check
      %p102 = pneg %p101
    $region14: #{_lambda_.1} parent=5 // pred_check_branch
      %104 = sbr.rel (%p102) target = $region16
    $region15: #{_lambda_.1} parent=5 // pred_region
      // Predicated region
      $region17: #{_lambda_.1} parent=15 // pred_check
        %p105 = pneg %p28
      $region18: #{_lambda_.1} parent=15 // pred_check_branch
        %107 = sbr.rel (%p105) target = $region20
      $region19: #{_lambda_.1} parent=15 // pred_region
        %p108 = scmp.lt.s32.totalorder %s8, 1
        %s109 = scalar_select %p108, %s8, 1
        %s110 = smul.addr %s109, 4
        %s111 = smul.addr %s110, 8
        %s112 = scalar_lea.vmem %s0, %s111
      $region20: #{_lambda_.1} parent=15 // pred_fallthru
        _
      // Predicated region
      $region21: #{_lambda_.1} parent=15 // pred_check
        %p113 = pneg %p54
      $region22: #{_lambda_.1} parent=15 // pred_check_branch
        %115 = sbr.rel (%p113) target = $region24
      $region23: #{_lambda_.1} parent=15 // pred_region
        %p116 = scmp.lt.s32.totalorder %s8, 7
        %s117 = scalar_select %p116, %s8, 7
        %s118 = smul.addr %s117, 2
        %s119 = smul.addr %s118, 8
        %s120 = scalar_lea.vmem %s1, %s119
      $region24: #{_lambda_.1} parent=15 // pred_fallthru
        _
    $region16: #{_lambda_.1} parent=5 // pred_fallthru
      _
    %p121 = scmp.le.s32.totalorder 1, %s8
    %p122 = scmp.lt.s32.totalorder %s8, 3
    %p123 = pnand %p121, %p122
    %p124 = pneg %p123
    // Predicated region
    $region25: #{_lambda_.1} parent=5 // pred_check
      _
    $region26: #{_lambda_.1} parent=5 // pred_check_branch
      %126 = sbr.rel (%p123) target = $region28
    $region27: #{_lambda_.1} parent=5 // pred_region
      %s127 = ssub.s32 %s8, 1
      %p128 = scmp.lt.s32.totalorder %s13, 1
      %s129 = scalar_select %p128, %s13, 1
      %s130 = smul.addr %s129, 4
      %s131 = smul.addr %s130, 8
      %s132 = scalar_lea.vmem %s0, %s131
      %p133 = pneg %p34
      %p134 = pneg %p31
      %p135 = scmp.lt.s32.totalorder %s13, 7
      %s136 = scalar_select %p135, %s13, 7
      %s137 = smul.addr %s136, 2
      %s138 = smul.addr %s137, 8
      %s139 = scalar_lea.vmem %s1, %s138
      %p140 = pneg %p60
      %p141 = pneg %p57
      %p142 = pneg %p86
      %p143 = pneg %p83
      %p144 = scmp.lt.s32.totalorder %s13, 1
      %s145 = scalar_select %p144, %s13, 1
      %s146 = smul.addr %s145, 4
      %s147 = smul.addr %s146, 8
      %s148 = scalar_lea.vmem %s2, %s147
      %p149 = scmp.lt.s32.totalorder %s13, 1
      %s150 = scalar_select %p149, %s13, 1
      %s151 = smul.addr %s150, 4
      %s152 = smul.addr %s151, 8
      %s153 = scalar_lea.vmem %s0, %s152
      %p154 = scmp.lt.s32.totalorder %s13, 7
      %s155 = scalar_select %p154, %s13, 7
      %s156 = smul.addr %s155, 2
      %s157 = smul.addr %s156, 8
      %s158 = scalar_lea.vmem %s1, %s157
      %p159 = scmp.lt.s32.totalorder %s13, 1
      %s160 = scalar_select %p159, %s13, 1
      %s161 = smul.addr %s160, 4
      %s162 = smul.addr %s161, 8
      %s163 = scalar_lea.vmem %s2, %s162
      %v164 = vld [vmem:[%s153] sm:$0xff]
      %v165 = vld [vmem:[%s153 + $0x8] sm:$0xff]
      %v166 = vld [vmem:[%s158] sm:$0xff]
      %v167 = vld [vmem:[%s158 + $0x8] sm:$0xff]
      %v168 = vadd.f32 %v164, %v166
      %v169 = vadd.f32 %v165, %v167
      %170 = vst [vmem:[%s163] sm:$0xff] %v168
      %171 = vst [vmem:[%s163 + $0x8] sm:$0xff] %v169
      %v172 = vld [vmem:[%s153 + $0x10] sm:$0xff]
      %v173 = vld [vmem:[%s153 + $0x18] sm:$0xff]
      %v174 = vld [vmem:[%s158] sm:$0xff]
      %v175 = vld [vmem:[%s158 + $0x8] sm:$0xff]
      %v176 = vadd.f32 %v172, %v174
      %v177 = vadd.f32 %v173, %v175
      %178 = vst [vmem:[%s163 + $0x10] sm:$0xff] %v176
      %179 = vst [vmem:[%s163 + $0x18] sm:$0xff] %v177
      %p180 = scmp.lt.s32.totalorder %s13, 1
      %s181 = scalar_select %p180, %s13, 1
      %s182 = smul.addr %s181, 4
      %s183 = smul.addr %s182, 8
      %s184 = scalar_lea.vmem %s2, %s183
      // Predicated region
      $region29: #{_lambda_.1} parent=27 // pred_check
        %p185 = pneg %p83
      $region30: #{_lambda_.1} parent=27 // pred_check_branch
        %187 = sbr.rel (%p185) target = $region32
      $region31: #{_lambda_.1} parent=27 // pred_region
        _
      $region32: #{_lambda_.1} parent=27 // pred_fallthru
        _
    $region28: #{_lambda_.1} parent=5 // pred_fallthru
      _
    %p188 = scmp.le.s32.totalorder 2, %s8
    // Predicated region
    $region33: #{_lambda_.1} parent=5 // pred_check
      %p189 = pneg %p188
    $region34: #{_lambda_.1} parent=5 // pred_check_branch
      %191 = sbr.rel (%p189) target = $region36
    $region35: #{_lambda_.1} parent=5 // pred_region
      %s192 = ssub.s32 %s8, 2
      // Predicated region
      $region37: #{_lambda_.1} parent=35 // pred_check
        %p193 = pneg %p89
      $region38: #{_lambda_.1} parent=35 // pred_check_branch
        %195 = sbr.rel (%p193) target = $region40
      $region39: #{_lambda_.1} parent=35 // pred_region
        %p196 = scmp.lt.s32.totalorder %s14, 1
        %s197 = scalar_select %p196, %s14, 1
        %s198 = smul.addr %s197, 4
        %s199 = smul.addr %s198, 8
        %s200 = scalar_lea.vmem %s2, %s199
      $region40: #{_lambda_.1} parent=35 // pred_fallthru
        _
    $region36: #{_lambda_.1} parent=5 // pred_fallthru
      _
  $region6: #{_lambda_.1} parent=0 // loop_footer
    %s12 = sadd.s32 1, %s8
  $region7: #{_lambda_.1} parent=0 // loop_footer_branch
    %7 = sbr.rel target = $region3
  $region8: #{_lambda_.1} parent=0 // loop_exit
    _

</llo_original>
